<compile_context>
chip_gen: v7x
topology: tpu7x:2x2x1
jax: 0.10.0
libtpu: 0.0.40
codegen_flags: <defaults>
</compile_context>

<pallas_src>
import functools

import jax
import jax.numpy as jnp
from jax.experimental import pallas as pl
from jax.experimental.pallas import tpu as pltpu


# ------------------------------ small helpers --------------------------------

_SINGLE_K_MAX = 2048            # K up to this -> one full-extent K block (no K loop)


def _round_up(x, m):
    return -(-x // m) * m


def _pick_tile(size, candidates):
    for c in candidates:
        if size % c == 0:
            return c
    return size


# ---------------- Pallas kernel 1a: single-K matmul + bias (+ ReLU) -----------

def _matmul_bias_1k_kernel(a_ref, b_ref, bias_ref, o_ref, *, apply_relu):
    """Whole reduction in one MXU pass; bias (+ optional ReLU) fused, no scratch."""
    r = jnp.dot(a_ref[...], b_ref[...], preferred_element_type=jnp.float32)
    r = r + bias_ref[...]
    if apply_relu:
        r = jnp.maximum(r, 0.0)
    o_ref[...] = r.astype(o_ref.dtype)


# ---------------- Pallas kernel 1b: K-tiled matmul + bias (+ ReLU) ------------

def _matmul_bias_kernel(a_ref, b_ref, bias_ref, o_ref, acc_ref, *, apply_relu):
    """K-accumulating tiled matmul; bias add (+ optional ReLU) fused on the last K step."""
    @pl.when(pl.program_id(2) == 0)
    def _():
        acc_ref[...] = jnp.zeros_like(acc_ref)

    acc_ref[...] += jnp.dot(a_ref[...], b_ref[...],
                            preferred_element_type=jnp.float32)

    @pl.when(pl.program_id(2) == pl.num_programs(2) - 1)
    def _():
        r = acc_ref[...] + bias_ref[...]
        if apply_relu:
            r = jnp.maximum(r, 0.0)
        o_ref[...] = r.astype(o_ref.dtype)


def matmul_bias(a, w, bias, *, relu=False, out_dtype=jnp.float32):
    """a: (M, K) bf16 activations; w: (Kw, Np) bf16 weight prepared at init (Np multiple of
    128; Kw == K for the single-K path, 128-aligned for the K-tiled path); bias: (1, Np) f32.
    Returns (M, Np) in out_dtype with fused bias (+ ReLU)."""
    M, K = a.shape
    Kw, Np = w.shape
    assert Np % 128 == 0 and bias.shape == (1, Np)

    if K != Kw:                       # safety fallback only (never hit with init_params)
        a = jnp.pad(a, ((0, 0), (0, Kw - K)))
        K = Kw

    Mp = _round_up(M, 8)
    tm = _pick_tile(Mp, (512, 256, 128, 64, 32, 16, 8))
    tn = _pick_tile(Np, (512, 256, 128))
    a_p = a if Mp == M else jnp.pad(a, ((0, Mp - M), (0, 0)))

    if K <= _SINGLE_K_MAX:
        # single full-extent K block: no K loop, no accumulator scratch, unpadded K allowed.
        out = pl.pallas_call(
            functools.partial(_matmul_bias_1k_kernel, apply_relu=relu),
            out_shape=jax.ShapeDtypeStruct((Mp, Np), out_dtype),
            grid_spec=pltpu.PrefetchScalarGridSpec(
                num_scalar_prefetch=0,
                grid=(Mp // tm, Np // tn),
                in_specs=[pl.BlockSpec((tm, K), lambda i, j: (i, 0)),
                          pl.BlockSpec((K, tn), lambda i, j: (0, j)),
                          pl.BlockSpec((1, tn), lambda i, j: (0, j))],
                out_specs=pl.BlockSpec((tm, tn), lambda i, j: (i, j))),
            compiler_params=pltpu.CompilerParams(
                dimension_semantics=("parallel", "parallel")),
        )(a_p, w, bias)
    else:
        assert K % 128 == 0
        tk = _pick_tile(K, (512, 256, 128))
        out = pl.pallas_call(
            functools.partial(_matmul_bias_kernel, apply_relu=relu),
            out_shape=jax.ShapeDtypeStruct((Mp, Np), out_dtype),
            grid_spec=pltpu.PrefetchScalarGridSpec(
                num_scalar_prefetch=0,
                grid=(Mp // tm, Np // tn, K // tk),
                in_specs=[pl.BlockSpec((tm, tk), lambda i, j, k: (i, k)),
                          pl.BlockSpec((tk, tn), lambda i, j, k: (k, j)),
                          pl.BlockSpec((1, tn), lambda i, j, k: (0, j))],
                out_specs=pl.BlockSpec((tm, tn), lambda i, j, k: (i, j)),
                scratch_shapes=[pltpu.VMEM((tm, tn), jnp.float32)]),
            compiler_params=pltpu.CompilerParams(
                dimension_semantics=("parallel", "parallel", "arbitrary")),
        )(a_p, w, bias)
    return out if Mp == M else out[:M]


# ------------- Pallas kernel 2: fused ConvLSTM recurrent step ------------------
# gates = h_patches @ W_h + gx (precomputed input->gate projection incl. bias);
# the sigmoid/tanh gate math and the c/h update run in the matmul epilogue.
# Gate columns are laid out hid-block-major ([i|f|o|g] per `hb`-wide channel block)
# so one output tile covers all 4 gates of a channel block.

def _convlstm_step_kernel(hp_ref, wh_ref, gx_ref, c_ref, h_ref, c_out_ref, acc_ref, *, hb):
    @pl.when(pl.program_id(1) == 0)
    def _():
        acc_ref[...] = jnp.zeros_like(acc_ref)

    acc_ref[...] += jnp.dot(hp_ref[...], wh_ref[...],
                            preferred_element_type=jnp.float32)

    @pl.when(pl.program_id(1) == pl.num_programs(1) - 1)
    def _():
        g = acc_ref[...] + gx_ref[...]                    # f32 gate pre-activations
        i = jax.nn.sigmoid(g[:, 0 * hb:1 * hb])
        f = jax.nn.sigmoid(g[:, 1 * hb:2 * hb])
        o = jax.nn.sigmoid(g[:, 2 * hb:3 * hb])
        gg = jnp.tanh(g[:, 3 * hb:4 * hb])
        c_next = f * c_ref[...] + i * gg                  # keep elementwise in f32 (v5e)
        c_out_ref[...] = c_next
        h_ref[...] = o * jnp.tanh(c_next)


def convlstm_step(h_patches, w_h, gx_t, c_prev, *, hid, hid_block):
    """h_patches: (M, 9*hid) bf16; w_h: (9*hid, 4*hid) bf16 (interleaved gate layout);
    gx_t: (M, 4*hid) f32; c_prev: (M, hid) f32.  Returns (h_next, c_next) f32."""
    M, K = h_patches.shape
    assert hid % hid_block == 0 and K == 9 * hid
    tk = _pick_tile(K, (512, 256, 128))
    nh = hid // hid_block
    gb = 4 * hid_block
    return pl.pallas_call(
        functools.partial(_convlstm_step_kernel, hb=hid_block),
        out_shape=(jax.ShapeDtypeStruct((M, hid), jnp.float32),
                   jax.ShapeDtypeStruct((M, hid), jnp.float32)),
        grid_spec=pltpu.PrefetchScalarGridSpec(
            num_scalar_prefetch=0,
            grid=(nh, K // tk),
            in_specs=[pl.BlockSpec((M, tk), lambda j, k: (0, k)),
                      pl.BlockSpec((tk, gb), lambda j, k: (k, j)),
                      pl.BlockSpec((M, gb), lambda j, k: (0, j)),
                      pl.BlockSpec((M, hid_block), lambda j, k: (0, j))],
            out_specs=[pl.BlockSpec((M, hid_block), lambda j, k: (0, j)),
                       pl.BlockSpec((M, hid_block), lambda j, k: (0, j))],
            scratch_shapes=[pltpu.VMEM((M, gb), jnp.float32)]),
        compiler_params=pltpu.CompilerParams(
            dimension_semantics=("parallel", "arbitrary")),
    )(h_patches, w_h, gx_t, c_prev)


# --------------------------------- conv glue ----------------------------------

def im2col_3x3(x):
    """NHWC (B,H,W,C) -> (B*H*W, 9*C) 'same'-padded stride-1 patches, in bf16."""
    x = x.astype(jnp.bfloat16)
    B, H, W, C = x.shape
    xp = jnp.pad(x, ((0, 0), (1, 1), (1, 1), (0, 0)))
    cols = [xp[:, dy:dy + H, dx:dx + W, :] for dy in range(3) for dx in range(3)]
    # TODO(synk): fold the 9 taps into the matmul's K grid axis (halo BlockSpec) so the 9x
    # patch matrix is never materialized in HBM.
    return jnp.concatenate(cols, axis=-1).reshape(B * H * W, 9 * C)


def conv3x3(x, p, *, relu, out_dtype=jnp.bfloat16):
    w, b, cout = p
    B, H, W, _ = x.shape
    y = matmul_bias(im2col_3x3(x), w, b, relu=relu, out_dtype=out_dtype)
    if cout != y.shape[1]:
        y = y[:, :cout]
    return y.reshape(B, H, W, cout)


def conv1x1(x, p, *, relu=False, out_dtype=jnp.float32):
    w, b, cout = p
    B, H, W, C = x.shape
    y = matmul_bias(x.reshape(B * H * W, C).astype(jnp.bfloat16), w, b,
                    relu=relu, out_dtype=out_dtype)
    if cout != y.shape[1]:
        y = y[:, :cout]
    return y.reshape(B, H, W, cout)


def maxpool2(x):
    # TODO(synk): fuse the 2x2 max-pool into the preceding conv's output writeback.
    B, H, W, C = x.shape
    return x.reshape(B, H // 2, 2, W // 2, 2, C).max(axis=(2, 4))


def upsample2_nearest(x):
    # TODO(synk): fuse the nearest-upsample (and skip concat) into the next conv's LHS load.
    return jnp.repeat(jnp.repeat(x, 2, axis=1), 2, axis=2)


# ------------------------------- model pieces ---------------------------------

def backbone_forward(x_nhwc, stage_params):
    """Simple 4-stage encoder (conv3x3+ReLU+maxpool2) -> /2, /4, /8, /16 features."""
    feats = []
    h = x_nhwc
    for p in stage_params:
        h = conv3x3(h, p, relu=True)
        h = maxpool2(h)
        feats.append(h)
    return feats


def convlstm_forward(seq_tm, layers):
    """seq_tm: time-major (T, B, Hh, Ww, Cin).  Returns h of the LAST layer at the LAST
    time step (== output[0][:, -1] in the PyTorch forward, return_all_layers=False)."""
    T, B, Hh, Ww, _ = seq_tm.shape
    M = B * Hh * Ww
    x_seq = seq_tm
    for lp in layers:
        hid, hb = lp['hid'], lp['hid_block']
        # Hoisted input->gate projection for ALL T steps as one batched matmul (bias fused).
        xp = im2col_3x3(x_seq.reshape(T * B, Hh, Ww, x_seq.shape[-1]))
        gx = matmul_bias(xp, lp['w_x'], lp['b'], relu=False, out_dtype=jnp.float32)
        gx = gx.reshape(T, M, 4 * hid)

        h = jnp.zeros((B, Hh, Ww, hid), jnp.float32)
        c = jnp.zeros((M, hid), jnp.float32)
        outs = []
        for t in range(T):
            hp = im2col_3x3(h)                                    # (M, 9*hid) bf16
            h2, c = convlstm_step(hp, lp['w_h'], gx[t], c, hid=hid, hid_block=hb)
            h = h2.reshape(B, Hh, Ww, hid)
            outs.append(h)
        x_seq = jnp.stack(outs, axis=0)                           # (T, B, Hh, Ww, hid)
    return x_seq[-1]


def up_block(x1, x2, block_params, *, use_skip):
    """`up`: nearest-upsample x1 to x2's spatial size, (optionally) concat skip, then
    double conv3x3+ReLU.  up1/up2 concat the skip (declared in_ch = 2*ch); up3/up4 don't."""
    if x2.shape[1] != x1.shape[1]:
        x1 = upsample2_nearest(x1)
    if use_skip:
        x1 = jnp.concatenate([x2.astype(x1.dtype), x1], axis=-1)
    p1, p2 = block_params
    h = conv3x3(x1, p1, relu=True)
    h = conv3x3(h, p2, relu=True)
    # TODO(synk): reference double_conv has BatchNorm; identity at eval-default stats, omitted.
    return h


# ---------------------------------- params ------------------------------------

def _conv_param(key, k_rows, cout):
    """Weight (k_rows, cout) stored bf16.  N is padded to a 128 multiple once at init;
    K stays unpadded for the single-K path (k_rows <= 2048) and must already be
    128-aligned for the tiled path (true for all long-K convs here)."""
    npad = _round_up(cout, 128)
    if k_rows > _SINGLE_K_MAX:
        assert k_rows % 128 == 0
    w = jax.random.normal(key, (k_rows, cout), jnp.float32) / jnp.sqrt(k_rows)
    w = jnp.pad(w, ((0, 0), (0, npad - cout))).astype(jnp.bfloat16)
    b = jnp.zeros((1, npad), jnp.float32)
    return (w, b, cout)


def _convlstm_param(key, cin, hid, hid_block):
    """Conv over cat(x, h) split into W_x (9*cin, 4*hid) + W_h (9*hid, 4*hid).
    Gate columns are interleaved per hid_block: [i|f|o|g] for each channel block, matching
    the fused step kernel's epilogue layout (weights are synthetic, so this is just the
    column convention -- the math is still a standard i,f,o,g ConvLSTM cell)."""
    fan_in = 9 * (cin + hid)
    kx, kh = jax.random.split(key)
    w_x = (jax.random.normal(kx, (9 * cin, 4 * hid), jnp.float32)
           / jnp.sqrt(fan_in)).astype(jnp.bfloat16)
    w_h = (jax.random.normal(kh, (9 * hid, 4 * hid), jnp.float32)
           / jnp.sqrt(fan_in)).astype(jnp.bfloat16)
    b = jnp.zeros((1, 4 * hid), jnp.float32)
    return dict(w_x=w_x, w_h=w_h, b=b, hid=hid, hid_block=hid_block)


def init_params(key, n_classes=2, hidden_dims=(512, 512)):
    keys = iter(jax.random.split(key, 32))
    p = {}
    bb_ch = [3, 32, 64, 256, 512]            # encoder channels; last = 512 at (4, 8)
    p['backbone'] = [_conv_param(next(keys), 9 * bb_ch[i], bb_ch[i + 1]) for i in range(4)]

    lstm = []
    cin = 512                                # ConvLSTM input_dim = 512
    for hid in hidden_dims:
        assert hid % 128 == 0
        hb = 256 if hid % 256 == 0 else 128
        lstm.append(_convlstm_param(next(keys), cin, hid, hb))
        cin = hid
    p['convlstm'] = lstm

    p['up1'] = (_conv_param(next(keys), 9 * 1024, 256), _conv_param(next(keys), 9 * 256, 256))
    p['up2'] = (_conv_param(next(keys), 9 * 512, 128), _conv_param(next(keys), 9 * 128, 128))
    p['up3'] = (_conv_param(next(keys), 9 * 128, 64), _conv_param(next(keys), 9 * 64, 64))
    p['up4'] = (_conv_param(next(keys), 9 * 64, 32), _conv_param(next(keys), 9 * 32, 32))
    p['outc'] = _conv_param(next(keys), 32, n_classes)
    return p


# --------------------------------- forward ------------------------------------

def unet_convlstm_forward(params, frames):
    """frames: list of T batched NCHW frames (B, 3, H, W) -- same convention as PyTorch."""
    B = frames[0].shape[0]
    cat_encodings = None
    lstm_seq = []
    for frame in frames:
        fr = jnp.transpose(frame, (0, 2, 3, 1)).astype(jnp.bfloat16)   # NCHW -> NHWC
        feats = backbone_forward(fr, params['backbone'])
        if cat_encodings is None:
            cat_encodings = list(feats)
        else:
            cat_encodings = [jnp.concatenate([c, f], axis=0)            # torch.cat(..., dim=0)
                             for c, f in zip(cat_encodings, feats)]
        lstm_seq.append(feats[-1])

    seq = jnp.stack(lstm_seq, axis=0)                      # time-major (T, B, 4, 8, 512)
    h_last = convlstm_forward(seq, params['convlstm'])     # (B, 4, 8, hidden[-1]) f32

    # NOTE: the PyTorch forward stacks per-frame encodings along the batch dim, which cannot
    # be channel-concatenated with the (batch B) LSTM output for T>1; we resolve the ambiguity
    # by using the LAST frame's encodings as skips (consistent with decoding the last step).
    skips = [c[-B:] for c in cat_encodings]

    out = up_block(h_last.astype(jnp.bfloat16), skips[3], params['up1'], use_skip=True)
    out = up_block(out, skips[2], params['up2'], use_skip=True)
    out = up_block(out, skips[1], params['up3'], use_skip=False)
    out = up_block(out, skips[0], params['up4'], use_skip=False)
    out = conv1x1(out, params['outc'], relu=False, out_dtype=jnp.float32)   # outconv: 1x1
    out = jnp.transpose(out, (0, 3, 1, 2))                 # NHWC -> NCHW
    # (PyTorch also computes torch.mean(output, dim=0) but discards it -- dead compute, omitted.)
    return out


# ----------------------------------- main --------------------------------------

if __name__ == "__main__":
    key = jax.random.PRNGKey(0)
    k_model, k_data = jax.random.split(key)

    n_classes = 2
    params = init_params(k_model, n_classes=n_classes, hidden_dims=(512, 512))

    # small, consistent shapes: B=2, T=2 frames, input image 3 x 64 x 128
    # (the /16 encoder feature is then 512 x 4 x 8 = the ConvLSTM input_size).
    B, T, H, W = 2, 2, 64, 128
    frames = [jax.random.normal(jax.random.fold_in(k_data, t), (B, 3, H, W), jnp.float32)
              for t in range(T)]

    out = unet_convlstm_forward(params, frames)
    out = jax.block_until_ready(out)
    assert out.shape == (B, n_classes, H // 2, W // 2), out.shape
    assert bool(jnp.all(jnp.isfinite(out)))
    print("KERNEL_OK")
</pallas_src>

<mosaic_0001>
module attributes {stable_mosaic.version = 11 : i64} {
  func.func @_matmul_bias_1k_kernel(%arg0: i32, %arg1: i32, %arg2: memref<512x27xbf16, #tpu.memory_space<vmem>>, %arg3: memref<27x128xbf16, #tpu.memory_space<vmem>>, %arg4: memref<1x128xf32, #tpu.memory_space<vmem>>, %arg5: memref<512x128xbf16, #tpu.memory_space<vmem>>) attributes {dimension_semantics = [#tpu.dimension_semantics<parallel>, #tpu.dimension_semantics<parallel>], iteration_bounds = array<i64: 32, 1>, scalar_prefetch = 0 : i64, scratch_operands = 0 : i64, tpu.core_type = #tpu.core_type<tc>, window_params = [{transform_indices = @transform_0, window_bounds = array<i64: 512, 27>}, {transform_indices = @transform_1, window_bounds = array<i64: 27, 128>}, {transform_indices = @transform_2, window_bounds = array<i64: 1, 128>}, {transform_indices = @transform_3, window_bounds = array<i64: 512, 128>}]} {
    %c0 = arith.constant 0 : index
    %c0_0 = arith.constant 0 : index
    %0 = vector.load %arg2[%c0, %c0_0] : memref<512x27xbf16, #tpu.memory_space<vmem>>, vector<512x27xbf16>
    %c0_1 = arith.constant 0 : index
    %c0_2 = arith.constant 0 : index
    %1 = vector.load %arg3[%c0_1, %c0_2] : memref<27x128xbf16, #tpu.memory_space<vmem>>, vector<27x128xbf16>
    %cst = arith.constant dense<0.000000e+00> : vector<512x128xf32>
    %2 = tpu.matmul %0, %1, %cst {dimension_numbers = #tpu.dot_dimension_numbers<[1], [0], [0], [1], [0, 0, 1, 1], [], []>} : vector<512x27xbf16>, vector<27x128xbf16>, vector<512x128xf32> -> vector<512x128xf32>
    %c0_3 = arith.constant 0 : index
    %c0_4 = arith.constant 0 : index
    %3 = vector.load %arg4[%c0_3, %c0_4] : memref<1x128xf32, #tpu.memory_space<vmem>>, vector<1x128xf32>
    %4 = vector.broadcast %3 : vector<1x128xf32> to vector<512x128xf32>
    %5 = arith.addf %2, %4 : vector<512x128xf32>
    %cst_5 = arith.constant 0.000000e+00 : f32
    %6 = vector.broadcast %cst_5 : f32 to vector<512x128xf32>
    %7 = arith.maximumf %5, %6 : vector<512x128xf32>
    %8 = arith.truncf %7 : vector<512x128xf32> to vector<512x128xbf16>
    %c0_6 = arith.constant 0 : index
    %c0_7 = arith.constant 0 : index
    %9 = vector.load %arg5[%c0_6, %c0_7] : memref<512x128xbf16, #tpu.memory_space<vmem>>, vector<512x128xbf16>
    tpu.vector_store %arg5[%c0_6, %c0_7], %8 {strides = array<i32>} : memref<512x128xbf16, #tpu.memory_space<vmem>>, vector<512x128xbf16>,
    return
  }
  func.func @transform_0(%arg0: i32, %arg1: i32) -> (i32, i32) {
    %c0_i32 = arith.constant 0 : i32
    %c0_i32_0 = arith.constant 0 : i32
    return %arg0, %c0_i32 : i32, i32
  }
  func.func @transform_1(%arg0: i32, %arg1: i32) -> (i32, i32) {
    %c0_i32 = arith.constant 0 : i32
    %c0_i32_0 = arith.constant 0 : i32
    return %c0_i32, %arg1 : i32, i32
  }
  func.func @transform_2(%arg0: i32, %arg1: i32) -> (i32, i32) {
    %c0_i32 = arith.constant 0 : i32
    %c0_i32_0 = arith.constant 0 : i32
    return %c0_i32, %arg1 : i32, i32
  }
  func.func @transform_3(%arg0: i32, %arg1: i32) -> (i32, i32) {
    %c0_i32 = arith.constant 0 : i32
    return %arg0, %arg1 : i32, i32
  }
}

</mosaic_0001>

<llo_original>
// kernel: tpu_custom_call.1
$region0: #{tpu_custom_call.1}
  #allocation0 [shape = 'u32[]', space=smem, size = 0x4, offset = 0x4, fixed_abs, tag = 'smem constant byte address 0x4 - core index']
  #allocation1 [shape = 'u32[144,128]{1,0:T(1,128)}', space=vmem, size = 0x12000, scoped, tag = 'internal scratch']
  %s0 = inlined_call_operand.vmem [shape: bf16[16384,27], index: 0, kind: input, shape index: {}]
  %s1 = inlined_call_operand.vmem [shape: bf16[27,128], index: 1, kind: input, shape index: {}]
  %s2 = inlined_call_operand.vmem [shape: f32[1,128], index: 2, kind: input, shape index: {}]
  %s3 = inlined_call_operand.hbm [shape: bf16[16384,128], index: 3, kind: output, shape index: {}]
  %s4 = sld [smem:[#allocation0]]
  $region45: #{tpu_custom_call.1} parent=0
    _
  %s6 = ssub.s32 1, %s4
  %s7 = scalar_select 0, %s6, %s4
  $region1: #{tpu_custom_call.1} parent=0
    #allocation2 [shape = 'u8[262144]{0}', space=vmem, size = 0x40000, scoped, tag = 'output window, operand 0']
    #allocation3 [shape = 's32[2]{0}', space=sflag, size = 0x8, scoped, tag = 'scoped memory for tpu_custom_call.1']
    %8 = vsyncpa [#allocation3], 0
    %s9 = scalar_lea.sflag [#allocation3], 1
    %10 = vsyncpa %s9, 0
    loop: start=0, step=1, limit=34
    $region2: #{tpu_custom_call.1} parent=1 // loop_pre_header
      _
    $region3: #{tpu_custom_call.1} parent=1 // loop_header
      %s12 = sphi 0, %s16
      %p13 = scmp.ge.s32.totalorder %s12, 34
      %s19 = sphi 0, %s31
      %s20 = sphi 0, %s27
      %s21 = sphi 0, %s19
      %s22 = sphi 0, %s20
      %s23 = sphi 0, %s21
      %s24 = sphi 0, %s22
      %s34 = sphi 0, %s36
      %s37 = sphi 0, %s34
      %s38 = sphi 0, %s37
      %s54 = sphi 0, %s38
      %s60 = sphi 0, %s62
      %s63 = sphi 0, %s60
      %s64 = sphi 0, %s63
      %s80 = sphi 0, %s64
      %s86 = sphi 0, %s88
      %s89 = sphi 0, %s86
      %s90 = sphi 0, %s89
      %s106 = sphi 0, %s90
      %s114 = sphi 0, %s116
      %s117 = sphi 0, %s114
      %s118 = sphi 0, %s117
      %s134 = sphi 0, %s118
    $region4: #{tpu_custom_call.1} parent=1 // loop_header_branch
      %15 = sbr.rel (%p13) target = $region8
    $region5: #{tpu_custom_call.1} parent=1 // loop_body
      %s17 = ssub.s32 %s12, 1
      %s18 = ssub.s32 %s12, 2
      %s25 = sadd.s32 1, %s20
      %p26 = scmp.ge.s32.totalorder %s25, 1
      %s27 = scalar_select %p26, 0, %s25
      %s28 = sadd.s32 1, %s19
      %s29 = scalar_select %p26, %s28, %s19
      %p30 = scmp.ge.s32.totalorder %s29, 32
      %s31 = scalar_select %p30, 0, %s29
      %s32 = ssub.s32 %s19, %s31
      %p33 = scmp.eq.s32.totalorder %s32, 0
      %s35 = sadd.s32 %s34, 1
      %s36 = scalar_select %p33, %s34, %s35
      %p39 = pneg %p33
      %p40 = scmp.eq.s32.totalorder %s12, 31
      %p41 = por %p39, %p40
      %p42 = scmp.ne.s32.totalorder %s34, %s37
      %p43 = scmp.eq.s32.totalorder %s12, 0
      %p44 = por %p42, %p43
      %p45 = scmp.ne.s32.totalorder %s34, %s37
      %p46 = scmp.eq.s32.totalorder %s17, 31
      %p47 = por %p45, %p46
      %p48 = scmp.ne.s32.totalorder %s37, %s38
      %p49 = scmp.eq.s32.totalorder %s17, 0
      %p50 = por %p48, %p49
      %p51 = scmp.ne.s32.totalorder %s37, %s38
      %p52 = scmp.eq.s32.totalorder %s18, 31
      %p53 = por %p51, %p52
      %p55 = scmp.ne.s32.totalorder %s38, %s54
      %p56 = scmp.eq.s32.totalorder %s18, 0
      %p57 = por %p55, %p56
      %s58 = ssub.s32 %s20, %s27
      %p59 = scmp.eq.s32.totalorder %s58, 0
      %s61 = sadd.s32 %s60, 1
      %s62 = scalar_select %p59, %s60, %s61
      %p65 = pneg %p59
      %p66 = scmp.eq.s32.totalorder %s12, 31
      %p67 = por %p65, %p66
      %p68 = scmp.ne.s32.totalorder %s60, %s63
      %p69 = scmp.eq.s32.totalorder %s12, 0
      %p70 = por %p68, %p69
      %p71 = scmp.ne.s32.totalorder %s60, %s63
      %p72 = scmp.eq.s32.totalorder %s17, 31
      %p73 = por %p71, %p72
      %p74 = scmp.ne.s32.totalorder %s63, %s64
      %p75 = scmp.eq.s32.totalorder %s17, 0
      %p76 = por %p74, %p75
      %p77 = scmp.ne.s32.totalorder %s63, %s64
      %p78 = scmp.eq.s32.totalorder %s18, 31
      %p79 = por %p77, %p78
      %p81 = scmp.ne.s32.totalorder %s64, %s80
      %p82 = scmp.eq.s32.totalorder %s18, 0
      %p83 = por %p81, %p82
      %s84 = ssub.s32 %s20, %s27
      %p85 = scmp.eq.s32.totalorder %s84, 0
      %s87 = sadd.s32 %s86, 1
      %s88 = scalar_select %p85, %s86, %s87
      %p91 = pneg %p85
      %p92 = scmp.eq.s32.totalorder %s12, 31
      %p93 = por %p91, %p92
      %p94 = scmp.ne.s32.totalorder %s86, %s89
      %p95 = scmp.eq.s32.totalorder %s12, 0
      %p96 = por %p94, %p95
      %p97 = scmp.ne.s32.totalorder %s86, %s89
      %p98 = scmp.eq.s32.totalorder %s17, 31
      %p99 = por %p97, %p98
      %p100 = scmp.ne.s32.totalorder %s89, %s90
      %p101 = scmp.eq.s32.totalorder %s17, 0
      %p102 = por %p100, %p101
      %p103 = scmp.ne.s32.totalorder %s89, %s90
      %p104 = scmp.eq.s32.totalorder %s18, 31
      %p105 = por %p103, %p104
      %p107 = scmp.ne.s32.totalorder %s90, %s106
      %p108 = scmp.eq.s32.totalorder %s18, 0
      %p109 = por %p107, %p108
      %s110 = ssub.s32 %s19, %s31
      %s111 = ssub.s32 %s20, %s27
      %s112 = sor.u32 %s110, %s111
      %p113 = scmp.eq.s32.totalorder %s112, 0
      %s115 = sadd.s32 %s114, 1
      %s116 = scalar_select %p113, %s114, %s115
      %p119 = pneg %p113
      %p120 = scmp.eq.s32.totalorder %s12, 31
      %p121 = por %p119, %p120
      %p122 = scmp.ne.s32.totalorder %s114, %s117
      %p123 = scmp.eq.s32.totalorder %s12, 0
      %p124 = por %p122, %p123
      %p125 = scmp.ne.s32.totalorder %s114, %s117
      %p126 = scmp.eq.s32.totalorder %s17, 31
      %p127 = por %p125, %p126
      %p128 = scmp.ne.s32.totalorder %s117, %s118
      %p129 = scmp.eq.s32.totalorder %s17, 0
      %p130 = por %p128, %p129
      %p131 = scmp.ne.s32.totalorder %s117, %s118
      %p132 = scmp.eq.s32.totalorder %s18, 31
      %p133 = por %p131, %p132
      %p135 = scmp.ne.s32.totalorder %s118, %s134
      %p136 = scmp.eq.s32.totalorder %s18, 0
      %p137 = por %p135, %p136
      %p138 = scmp.le.s32.totalorder 1, %s12
      %p139 = scmp.lt.s32.totalorder %s12, 33
      %p140 = pnand %p138, %p139
      %p141 = pneg %p140
      // Predicated region
      $region9: #{tpu_custom_call.1} parent=5 // pred_check
        _
      $region10: #{tpu_custom_call.1} parent=5 // pred_check_branch
        %143 = sbr.rel (%p140) target = $region12
      $region11: #{tpu_custom_call.1} parent=5 // pred_region
        %s144 = ssub.s32 %s12, 1
        // Predicated region
        $region13: #{tpu_custom_call.1} parent=11 // pred_check
          %p145 = pneg %p76
        $region14: #{tpu_custom_call.1} parent=11 // pred_check_branch
          %147 = sbr.rel (%p145) target = $region16
        $region15: #{tpu_custom_call.1} parent=11 // pred_region
          %p148 = scmp.lt.s32.totalorder %s22, 0
          %s149 = scalar_select %p148, %s22, 0
          %s150 = smul.addr %s149, 4
          %s151 = scalar_lea.vmem %s1, %s150
        $region16: #{tpu_custom_call.1} parent=11 // pred_fallthru
          _
        // Predicated region
        $region17: #{tpu_custom_call.1} parent=11 // pred_check
          %p152 = pneg %p102
        $region18: #{tpu_custom_call.1} parent=11 // pred_check_branch
          %154 = sbr.rel (%p152) target = $region20
        $region19: #{tpu_custom_call.1} parent=11 // pred_region
          %p155 = scmp.lt.s32.totalorder %s22, 0
          %s156 = scalar_select %p155, %s22, 0
          %s157 = scalar_lea.vmem %s2, %s156
        $region20: #{tpu_custom_call.1} parent=11 // pred_fallthru
          _
      $region12: #{tpu_custom_call.1} parent=5 // pred_fallthru
        _
      %p158 = scmp.lt.s32.totalorder %s12, 32
      // Predicated region
      $region21: #{tpu_custom_call.1} parent=5 // pred_check
        %p159 = pneg %p158
      $region22: #{tpu_custom_call.1} parent=5 // pred_check_branch
        %161 = sbr.rel (%p159) target = $region24
      $region23: #{tpu_custom_call.1} parent=5 // pred_region
        // Predicated region
        $region25: #{tpu_custom_call.1} parent=23 // pred_check
          %p162 = pneg %p44
        $region26: #{tpu_custom_call.1} parent=23 // pred_check_branch
          %164 = sbr.rel (%p162) target = $region28
        $region27: #{tpu_custom_call.1} parent=23 // pred_region
          %s165 = smul.u32 64, %s19
          %p166 = scmp.lt.s32.totalorder %s165, 2047
          %s167 = scalar_select %p166, %s165, 2047
          %s168 = smul.addr %s167, 4
          %s169 = scalar_lea.vmem %s0, %s168
          %s170 = smul.u32 64, %s19
        $region28: #{tpu_custom_call.1} parent=23 // pred_fallthru
          _
      $region24: #{tpu_custom_call.1} parent=5 // pred_fallthru
        _
      %p171 = scmp.le.s32.totalorder 1, %s12
      %p172 = scmp.lt.s32.totalorder %s12, 33
      %p173 = pnand %p171, %p172
      %p174 = pneg %p173
      // Predicated region
      $region29: #{tpu_custom_call.1} parent=5 // pred_check
        _
      $region30: #{tpu_custom_call.1} parent=5 // pred_check_branch
        %176 = sbr.rel (%p173) target = $region32
      $region31: #{tpu_custom_call.1} parent=5 // pred_region
        %s177 = ssub.s32 %s12, 1
        %s178 = smul.u32 64, %s21
        %p179 = scmp.lt.s32.totalorder %s178, 2047
        %s180 = scalar_select %p179, %s178, 2047
        %s181 = smul.addr %s180, 4
        %s182 = scalar_lea.vmem %s0, %s181
        %p183 = pneg %p50
        %p184 = pneg %p47
        %p185 = scmp.lt.s32.totalorder %s22, 0
        %s186 = scalar_select %p185, %s22, 0
        %s187 = smul.addr %s186, 4
        %s188 = scalar_lea.vmem %s1, %s187
        %p189 = pneg %p76
        %p190 = pneg %p73
        %p191 = scmp.lt.s32.totalorder %s22, 0
        %s192 = scalar_select %p191, %s22, 0
        %s193 = scalar_lea.vmem %s2, %s192
        %p194 = pneg %p102
        %p195 = pneg %p99
        %p196 = pneg %p130
        %p197 = pneg %p127
        %s198 = sand.u32 %s117, 1
        %s199 = scalar_lea.sflag [#allocation3], %s198
        %s200 = sand.u32 %s117, 1
        %s201 = smul.addr %s200, 256
        %s202 = scalar_lea.vmem [#allocation2], %s201
        %s203 = smul.u32 64, %s21
        %p204 = scmp.lt.s32.totalorder %s203, 2047
        %s205 = scalar_select %p204, %s203, 2047
        %s206 = smul.addr %s205, 4
        %s207 = scalar_lea.vmem %s0, %s206
        %s208 = smul.u32 64, %s21
        %p209 = scmp.lt.s32.totalorder %s22, 0
        %s210 = scalar_select %p209, %s22, 0
        %s211 = smul.addr %s210, 4
        %s212 = scalar_lea.vmem %s1, %s211
        %p213 = scmp.lt.s32.totalorder %s22, 0
        %s214 = scalar_select %p213, %s22, 0
        %s215 = scalar_lea.vmem %s2, %s214
        %s216 = smul.u32 64, %s21
        %v218 = vld [vmem:[%s207] sm:$0xf]
        %v219 = vld [vmem:[%s207 + $0x4] sm:$0xf]
        %v220 = vld [vmem:[%s207 + $0x8] sm:$0xf]
        %v221 = vld [vmem:[%s207 + $0xc] sm:$0xf]
        %v222 = vld [vmem:[%s207 + $0x10] sm:$0xf]
        %v223 = vld [vmem:[%s207 + $0x14] sm:$0xf]
        %v224 = vld [vmem:[%s207 + $0x18] sm:$0xf]
        %v225 = vld [vmem:[%s207 + $0x1c] sm:$0xf]
        %v226 = vld [vmem:[%s207 + $0x20] sm:$0xf]
        %v227 = vld [vmem:[%s207 + $0x24] sm:$0xf]
        %v228 = vld [vmem:[%s207 + $0x28] sm:$0xf]
        %v229 = vld [vmem:[%s207 + $0x2c] sm:$0xf]
        %v230 = vld [vmem:[%s207 + $0x30] sm:$0xf]
        %v231 = vld [vmem:[%s207 + $0x34] sm:$0xf]
        %v232 = vld [vmem:[%s207 + $0x38] sm:$0xf]
        %v233 = vld [vmem:[%s207 + $0x3c] sm:$0xf]
        %v234 = vld [vmem:[%s207 + $0x40] sm:$0xf]
        %v235 = vld [vmem:[%s207 + $0x44] sm:$0xf]
        %v236 = vld [vmem:[%s207 + $0x48] sm:$0xf]
        %v237 = vld [vmem:[%s207 + $0x4c] sm:$0xf]
        %v238 = vld [vmem:[%s207 + $0x50] sm:$0xf]
        %v239 = vld [vmem:[%s207 + $0x54] sm:$0xf]
        %v240 = vld [vmem:[%s207 + $0x58] sm:$0xf]
        %v241 = vld [vmem:[%s207 + $0x5c] sm:$0xf]
        %v242 = vld [vmem:[%s207 + $0x60] sm:$0xf]
        %v243 = vld [vmem:[%s207 + $0x64] sm:$0xf]
        %v244 = vld [vmem:[%s207 + $0x68] sm:$0xf]
        %v245 = vld [vmem:[%s207 + $0x6c] sm:$0xf]
        %v246 = vld [vmem:[%s207 + $0x70] sm:$0xf]
        %v247 = vld [vmem:[%s207 + $0x74] sm:$0xf]
        %v248 = vld [vmem:[%s207 + $0x78] sm:$0xf]
        %v249 = vld [vmem:[%s207 + $0x7c] sm:$0xf]
        %v250 = vld [vmem:[%s207 + $0x80] sm:$0xf]
        %v251 = vld [vmem:[%s207 + $0x84] sm:$0xf]
        %v252 = vld [vmem:[%s207 + $0x88] sm:$0xf]
        %v253 = vld [vmem:[%s207 + $0x8c] sm:$0xf]
        %v254 = vld [vmem:[%s207 + $0x90] sm:$0xf]
        %v255 = vld [vmem:[%s207 + $0x94] sm:$0xf]
        %v256 = vld [vmem:[%s207 + $0x98] sm:$0xf]
        %v257 = vld [vmem:[%s207 + $0x9c] sm:$0xf]
        %v258 = vld [vmem:[%s207 + $0xa0] sm:$0xf]
        %v259 = vld [vmem:[%s207 + $0xa4] sm:$0xf]
        %v260 = vld [vmem:[%s207 + $0xa8] sm:$0xf]
        %v261 = vld [vmem:[%s207 + $0xac] sm:$0xf]
        %v262 = vld [vmem:[%s207 + $0xb0] sm:$0xf]
        %v263 = vld [vmem:[%s207 + $0xb4] sm:$0xf]
        %v264 = vld [vmem:[%s207 + $0xb8] sm:$0xf]
        %v265 = vld [vmem:[%s207 + $0xbc] sm:$0xf]
        %v266 = vld [vmem:[%s207 + $0xc0] sm:$0xf]
        %v267 = vld [vmem:[%s207 + $0xc4] sm:$0xf]
        %v268 = vld [vmem:[%s207 + $0xc8] sm:$0xf]
        %v269 = vld [vmem:[%s207 + $0xcc] sm:$0xf]
        %v270 = vld [vmem:[%s207 + $0xd0] sm:$0xf]
        %v271 = vld [vmem:[%s207 + $0xd4] sm:$0xf]
        %v272 = vld [vmem:[%s207 + $0xd8] sm:$0xf]
        %v273 = vld [vmem:[%s207 + $0xdc] sm:$0xf]
        %v274 = vld [vmem:[%s207 + $0xe0] sm:$0xf]
        %v275 = vld [vmem:[%s207 + $0xe4] sm:$0xf]
        %v276 = vld [vmem:[%s207 + $0xe8] sm:$0xf]
        %v277 = vld [vmem:[%s207 + $0xec] sm:$0xf]
        %v278 = vld [vmem:[%s207 + $0xf0] sm:$0xf]
        %v279 = vld [vmem:[%s207 + $0xf4] sm:$0xf]
        %v280 = vld [vmem:[%s207 + $0xf8] sm:$0xf]
        %v281 = vld [vmem:[%s207 + $0xfc] sm:$0xf]
        %v282 = vld [vmem:[%s212] sm:$0xf]
        %v283 = vld [vmem:[%s212 + $0x4] sm:$0xf]
        %v284 = vld [vmem:[%s212 + $0x8] sm:$0xf]
        %v285 = vld [vmem:[%s212 + $0xc] sm:$0x3]
        %v286 = vld [vmem:[%s215] sm:$0x1]
        %v288 = vlaneseq
        %v289 = vshrl.u32 %v288, 7
        %v290 = vsub.s32 0, %v289
        %v291 = vrot.slane %v286, %v290
        %v357 = vunpack.c.l.b16 %v218
        %v358 = vunpack.c.l.b16 %v219
        %v359 = vunpack.c.l.b16 %v220
        %v360 = vunpack.c.l.b16 %v221
        %v361 = vunpack.c.l.b16 %v222
        %v362 = vunpack.c.l.b16 %v223
        %v363 = vunpack.c.l.b16 %v224
        %v364 = vunpack.c.l.b16 %v225
        %v365 = vunpack.c.l.b16 %v226
        %v366 = vunpack.c.l.b16 %v227
        %v367 = vunpack.c.l.b16 %v228
        %v368 = vunpack.c.l.b16 %v229
        %v369 = vunpack.c.l.b16 %v230
        %v370 = vunpack.c.l.b16 %v231
        %v371 = vunpack.c.l.b16 %v232
        %v372 = vunpack.c.l.b16 %v233
        %v373 = vunpack.c.l.b16 %v234
        %v374 = vunpack.c.l.b16 %v235
        %v375 = vunpack.c.l.b16 %v236
        %v376 = vunpack.c.l.b16 %v237
        %v377 = vunpack.c.l.b16 %v238
        %v378 = vunpack.c.l.b16 %v239
        %v379 = vunpack.c.l.b16 %v240
        %v380 = vunpack.c.l.b16 %v241
        %v381 = vunpack.c.l.b16 %v242
        %v382 = vunpack.c.l.b16 %v243
        %v383 = vunpack.c.l.b16 %v244
        %v384 = vunpack.c.l.b16 %v245
        %v385 = vunpack.c.l.b16 %v246
        %v386 = vunpack.c.l.b16 %v247
        %v387 = vunpack.c.l.b16 %v248
        %v388 = vunpack.c.l.b16 %v249
        %v389 = vunpack.c.l.b16 %v250
        %v390 = vunpack.c.l.b16 %v251
        %v391 = vunpack.c.l.b16 %v252
        %v392 = vunpack.c.l.b16 %v253
        %v393 = vunpack.c.l.b16 %v254
        %v394 = vunpack.c.l.b16 %v255
        %v395 = vunpack.c.l.b16 %v256
        %v396 = vunpack.c.l.b16 %v257
        %v397 = vunpack.c.l.b16 %v258
        %v398 = vunpack.c.l.b16 %v259
        %v399 = vunpack.c.l.b16 %v260
        %v400 = vunpack.c.l.b16 %v261
        %v401 = vunpack.c.l.b16 %v262
        %v402 = vunpack.c.l.b16 %v263
        %v403 = vunpack.c.l.b16 %v264
        %v404 = vunpack.c.l.b16 %v265
        %v405 = vunpack.c.l.b16 %v266
        %v406 = vunpack.c.l.b16 %v267
        %v407 = vunpack.c.l.b16 %v268
        %v408 = vunpack.c.l.b16 %v269
        %v409 = vunpack.c.l.b16 %v270
        %v410 = vunpack.c.l.b16 %v271
        %v411 = vunpack.c.l.b16 %v272
        %v412 = vunpack.c.l.b16 %v273
        %v413 = vunpack.c.l.b16 %v274
        %v414 = vunpack.c.l.b16 %v275
        %v415 = vunpack.c.l.b16 %v276
        %v416 = vunpack.c.l.b16 %v277
        %v417 = vunpack.c.l.b16 %v278
        %v418 = vunpack.c.l.b16 %v279
        %v419 = vunpack.c.l.b16 %v280
        %v420 = vunpack.c.l.b16 %v281
        %v421 = vpack.c.b16 %v358, %v357
        %v422 = vpack.c.b16 %v360, %v359
        %v423 = vpack.c.b16 %v362, %v361
        %v424 = vpack.c.b16 %v364, %v363
        %v425 = vpack.c.b16 %v366, %v365
        %v426 = vpack.c.b16 %v368, %v367
        %v427 = vpack.c.b16 %v370, %v369
        %v428 = vpack.c.b16 %v372, %v371
        %v429 = vpack.c.b16 %v374, %v373
        %v430 = vpack.c.b16 %v376, %v375
        %v431 = vpack.c.b16 %v378, %v377
        %v432 = vpack.c.b16 %v380, %v379
        %v433 = vpack.c.b16 %v382, %v381
        %v434 = vpack.c.b16 %v384, %v383
        %v435 = vpack.c.b16 %v386, %v385
        %v436 = vpack.c.b16 %v388, %v387
        %v437 = vpack.c.b16 %v390, %v389
        %v438 = vpack.c.b16 %v392, %v391
        %v439 = vpack.c.b16 %v394, %v393
        %v440 = vpack.c.b16 %v396, %v395
        %v441 = vpack.c.b16 %v398, %v397
        %v442 = vpack.c.b16 %v400, %v399
        %v443 = vpack.c.b16 %v402, %v401
        %v444 = vpack.c.b16 %v404, %v403
        %v445 = vpack.c.b16 %v406, %v405
        %v446 = vpack.c.b16 %v408, %v407
        %v447 = vpack.c.b16 %v410, %v409
        %v448 = vpack.c.b16 %v412, %v411
        %v449 = vpack.c.b16 %v414, %v413
        %v450 = vpack.c.b16 %v416, %v415
        %v451 = vpack.c.b16 %v418, %v417
        %v452 = vpack.c.b16 %v420, %v419
        %v457 = vunpack.c.l.b16 %v282
        %v458 = vunpack.c.l.b16 %v283
        %v459 = vunpack.c.l.b16 %v284
        %v460 = vunpack.c.l.b16 %v285
        %v461 = vpack.c.b16 %v458, %v457
        %v462 = vpack.c.b16 %v460, %v459
        %vm464 = vcmask 220160
        %v466 = vsel %vm464, %v421, 0
        %v469 = vsel %vm464, %v422, 0
        %v472 = vsel %vm464, %v423, 0
        %v475 = vsel %vm464, %v424, 0
        %v478 = vsel %vm464, %v425, 0
        %v481 = vsel %vm464, %v426, 0
        %v484 = vsel %vm464, %v427, 0
        %v487 = vsel %vm464, %v428, 0
        %v490 = vsel %vm464, %v429, 0
        %v493 = vsel %vm464, %v430, 0
        %v496 = vsel %vm464, %v431, 0
        %v499 = vsel %vm464, %v432, 0
        %v502 = vsel %vm464, %v433, 0
        %v505 = vsel %vm464, %v434, 0
        %v508 = vsel %vm464, %v435, 0
        %v511 = vsel %vm464, %v436, 0
        %v514 = vsel %vm464, %v437, 0
        %v517 = vsel %vm464, %v438, 0
        %v520 = vsel %vm464, %v439, 0
        %v523 = vsel %vm464, %v440, 0
        %v526 = vsel %vm464, %v441, 0
        %v529 = vsel %vm464, %v442, 0
        %v532 = vsel %vm464, %v443, 0
        %v535 = vsel %vm464, %v444, 0
        %v538 = vsel %vm464, %v445, 0
        %v541 = vsel %vm464, %v446, 0
        %v544 = vsel %vm464, %v447, 0
        %v547 = vsel %vm464, %v448, 0
        %v550 = vsel %vm464, %v449, 0
        %v553 = vsel %vm464, %v450, 0
        %v556 = vsel %vm464, %v451, 0
        %v559 = vsel %vm464, %v452, 0
        %vm561 = vcmask 1044480
        %vm562 = vcmask 1045504
        %v563 = vsel %vm561, 4294967295, 65535
        %v564 = vsel %vm562, %v563, 0
        %v566 = vand.u32 %v462, %v564
        %568 = vmatprep.subr.bf16.mxu0 0
        %569 = vmatpush1.bf16.msra.mxu0 %v461
        %570 = vmatprep.subr.bf16.mxu0 0
        %571 = vmatpush1.bf16.msra.mxu0 %v566
        %572 = vmatprep.subr.bf16.mxu0 0
        %573 = vmatpush1.bf16.msra.mxu0 0
        %574 = vmatprep.subr.bf16.mxu0 0
        %575 = vmatpush1.bf16.msra.mxu0 0
        %576 = vmatprep.subr.bf16.mxu0 0
        %577 = vmatpush1.bf16.msra.mxu0 0
        %578 = vmatprep.subr.bf16.mxu0 0
        %579 = vmatpush1.bf16.msra.mxu0 0
        %580 = vmatprep.subr.bf16.mxu0 0
        %581 = vmatpush1.bf16.msra.mxu0 0
        %582 = vmatprep.subr.bf16.mxu0 0
        %583 = vmatpush1.bf16.msra.mxu0 0
        %584 = vmatprep.subr.bf16.mxu0 0
        %585 = vmatpush1.bf16.msra.mxu0 0
        %586 = vmatprep.subr.bf16.mxu0 0
        %587 = vmatpush1.bf16.msra.mxu0 0
        %588 = vmatprep.subr.bf16.mxu0 0
        %589 = vmatpush1.bf16.msra.mxu0 0
        %590 = vmatprep.subr.bf16.mxu0 0
        %591 = vmatpush1.bf16.msra.mxu0 0
        %592 = vmatprep.subr.bf16.mxu0 0
        %593 = vmatpush1.bf16.msra.mxu0 0
        %594 = vmatprep.subr.bf16.mxu0 0
        %595 = vmatpush1.bf16.msra.mxu0 0
        %596 = vmatprep.subr.bf16.mxu0 0
        %597 = vmatpush1.bf16.msra.mxu0 0
        %598 = vmatprep.subr.bf16.mxu0 0
        %599 = vmatpush1.bf16.msra.mxu0 0
        %600 = vmatprep.mubr.bf16.mxu0 0
        %601 = vmatmul.mubr.bf16.gmra.mrb[0].mxu0 %v466
        %v602 = vpop.f32.mrb[0].mxu0
        %v603 = vadd.f32 %v291, %v602
        %v604 = vpop.f32.mrb[0].mxu0
        %v605 = vpop.f32.mrb[0].mxu0
        %v606 = vadd.f32 %v291, %v605
        %v607 = vpop.f32.mrb[0].mxu0
        %608 = vmatprep.mubr.bf16.mxu0 0
        %609 = vmatmul.mubr.bf16.gmra.mrb[0].mxu0 %v469
        %v610 = vpop.f32.mrb[0].mxu0
        %v611 = vadd.f32 %v291, %v610
        %v612 = vpop.f32.mrb[0].mxu0
        %v613 = vpop.f32.mrb[0].mxu0
        %v614 = vadd.f32 %v291, %v613
        %v615 = vpop.f32.mrb[0].mxu0
        %616 = vmatprep.mubr.bf16.mxu0 0
        %617 = vmatmul.mubr.bf16.gmra.mrb[0].mxu0 %v472
        %v618 = vpop.f32.mrb[0].mxu0
        %v619 = vadd.f32 %v291, %v618
        %v620 = vpop.f32.mrb[0].mxu0
        %v621 = vpop.f32.mrb[0].mxu0
        %v622 = vadd.f32 %v291, %v621
        %v623 = vpop.f32.mrb[0].mxu0
        %624 = vmatprep.mubr.bf16.mxu0 0
        %625 = vmatmul.mubr.bf16.gmra.mrb[0].mxu0 %v475
        %v626 = vpop.f32.mrb[0].mxu0
        %v627 = vadd.f32 %v291, %v626
        %v628 = vpop.f32.mrb[0].mxu0
        %v629 = vpop.f32.mrb[0].mxu0
        %v630 = vadd.f32 %v291, %v629
        %v631 = vpop.f32.mrb[0].mxu0
        %632 = vmatprep.mubr.bf16.mxu0 0
        %633 = vmatmul.mubr.bf16.gmra.mrb[0].mxu0 %v478
        %v634 = vpop.f32.mrb[0].mxu0
        %v635 = vadd.f32 %v291, %v634
        %v636 = vpop.f32.mrb[0].mxu0
        %v637 = vpop.f32.mrb[0].mxu0
        %v638 = vadd.f32 %v291, %v637
        %v639 = vpop.f32.mrb[0].mxu0
        %640 = vmatprep.mubr.bf16.mxu0 0
        %641 = vmatmul.mubr.bf16.gmra.mrb[0].mxu0 %v481
        %v642 = vpop.f32.mrb[0].mxu0
        %v643 = vadd.f32 %v291, %v642
        %v644 = vpop.f32.mrb[0].mxu0
        %v645 = vpop.f32.mrb[0].mxu0
        %v646 = vadd.f32 %v291, %v645
        %v647 = vpop.f32.mrb[0].mxu0
        %648 = vmatprep.mubr.bf16.mxu0 0
        %649 = vmatmul.mubr.bf16.gmra.mrb[0].mxu0 %v484
        %v650 = vpop.f32.mrb[0].mxu0
        %v651 = vadd.f32 %v291, %v650
        %v652 = vpop.f32.mrb[0].mxu0
        %v653 = vpop.f32.mrb[0].mxu0
        %v654 = vadd.f32 %v291, %v653
        %v655 = vpop.f32.mrb[0].mxu0
        %656 = vmatprep.mubr.bf16.mxu0 0
        %657 = vmatmul.mubr.bf16.gmra.mrb[0].mxu0 %v487
        %v658 = vpop.f32.mrb[0].mxu0
        %v659 = vadd.f32 %v291, %v658
        %v660 = vpop.f32.mrb[0].mxu0
        %v661 = vpop.f32.mrb[0].mxu0
        %v662 = vadd.f32 %v291, %v661
        %v663 = vpop.f32.mrb[0].mxu0
        %664 = vmatprep.mubr.bf16.mxu0 0
        %665 = vmatmul.mubr.bf16.gmra.mrb[0].mxu0 %v490
        %v666 = vpop.f32.mrb[0].mxu0
        %v667 = vadd.f32 %v291, %v666
        %v668 = vpop.f32.mrb[0].mxu0
        %v669 = vpop.f32.mrb[0].mxu0
        %v670 = vadd.f32 %v291, %v669
        %v671 = vpop.f32.mrb[0].mxu0
        %672 = vmatprep.mubr.bf16.mxu0 0
        %673 = vmatmul.mubr.bf16.gmra.mrb[0].mxu0 %v493
        %v674 = vpop.f32.mrb[0].mxu0
        %v675 = vadd.f32 %v291, %v674
        %v676 = vpop.f32.mrb[0].mxu0
        %v677 = vpop.f32.mrb[0].mxu0
        %v678 = vadd.f32 %v291, %v677
        %v679 = vpop.f32.mrb[0].mxu0
        %680 = vmatprep.mubr.bf16.mxu0 0
        %681 = vmatmul.mubr.bf16.gmra.mrb[0].mxu0 %v496
        %v682 = vpop.f32.mrb[0].mxu0
        %v683 = vadd.f32 %v291, %v682
        %v684 = vpop.f32.mrb[0].mxu0
        %v685 = vpop.f32.mrb[0].mxu0
        %v686 = vadd.f32 %v291, %v685
        %v687 = vpop.f32.mrb[0].mxu0
        %688 = vmatprep.mubr.bf16.mxu0 0
        %689 = vmatmul.mubr.bf16.gmra.mrb[0].mxu0 %v499
        %v690 = vpop.f32.mrb[0].mxu0
        %v691 = vadd.f32 %v291, %v690
        %v692 = vpop.f32.mrb[0].mxu0
        %v693 = vpop.f32.mrb[0].mxu0
        %v694 = vadd.f32 %v291, %v693
        %v695 = vpop.f32.mrb[0].mxu0
        %696 = vmatprep.mubr.bf16.mxu0 0
        %697 = vmatmul.mubr.bf16.gmra.mrb[0].mxu0 %v502
        %v698 = vpop.f32.mrb[0].mxu0
        %v699 = vadd.f32 %v291, %v698
        %v700 = vpop.f32.mrb[0].mxu0
        %v701 = vpop.f32.mrb[0].mxu0
        %v702 = vadd.f32 %v291, %v701
        %v703 = vpop.f32.mrb[0].mxu0
        %704 = vmatprep.mubr.bf16.mxu0 0
        %705 = vmatmul.mubr.bf16.gmra.mrb[0].mxu0 %v505
        %v706 = vpop.f32.mrb[0].mxu0
        %v707 = vadd.f32 %v291, %v706
        %v708 = vpop.f32.mrb[0].mxu0
        %v709 = vpop.f32.mrb[0].mxu0
        %v710 = vadd.f32 %v291, %v709
        %v711 = vpop.f32.mrb[0].mxu0
        %712 = vmatprep.mubr.bf16.mxu0 0
        %713 = vmatmul.mubr.bf16.gmra.mrb[0].mxu0 %v508
        %v714 = vpop.f32.mrb[0].mxu0
        %v715 = vadd.f32 %v291, %v714
        %v716 = vpop.f32.mrb[0].mxu0
        %v717 = vpop.f32.mrb[0].mxu0
        %v718 = vadd.f32 %v291, %v717
        %v719 = vpop.f32.mrb[0].mxu0
        %720 = vmatprep.mubr.bf16.mxu0 0
        %721 = vmatmul.mubr.bf16.gmra.mrb[0].mxu0 %v511
        %v722 = vpop.f32.mrb[0].mxu0
        %v723 = vadd.f32 %v291, %v722
        %v724 = vpop.f32.mrb[0].mxu0
        %v725 = vpop.f32.mrb[0].mxu0
        %v726 = vadd.f32 %v291, %v725
        %v727 = vpop.f32.mrb[0].mxu0
        %728 = vmatprep.mubr.bf16.mxu0 0
        %729 = vmatmul.mubr.bf16.gmra.mrb[0].mxu0 %v514
        %v730 = vpop.f32.mrb[0].mxu0
        %v731 = vadd.f32 %v291, %v730
        %v732 = vpop.f32.mrb[0].mxu0
        %v733 = vpop.f32.mrb[0].mxu0
        %v734 = vadd.f32 %v291, %v733
        %v735 = vpop.f32.mrb[0].mxu0
        %736 = vmatprep.mubr.bf16.mxu0 0
        %737 = vmatmul.mubr.bf16.gmra.mrb[0].mxu0 %v517
        %v738 = vpop.f32.mrb[0].mxu0
        %v739 = vadd.f32 %v291, %v738
        %v740 = vpop.f32.mrb[0].mxu0
        %v741 = vpop.f32.mrb[0].mxu0
        %v742 = vadd.f32 %v291, %v741
        %v743 = vpop.f32.mrb[0].mxu0
        %744 = vmatprep.mubr.bf16.mxu0 0
        %745 = vmatmul.mubr.bf16.gmra.mrb[0].mxu0 %v520
        %v746 = vpop.f32.mrb[0].mxu0
        %v747 = vadd.f32 %v291, %v746
        %v748 = vpop.f32.mrb[0].mxu0
        %v749 = vpop.f32.mrb[0].mxu0
        %v750 = vadd.f32 %v291, %v749
        %v751 = vpop.f32.mrb[0].mxu0
        %752 = vmatprep.mubr.bf16.mxu0 0
        %753 = vmatmul.mubr.bf16.gmra.mrb[0].mxu0 %v523
        %v754 = vpop.f32.mrb[0].mxu0
        %v755 = vadd.f32 %v291, %v754
        %v756 = vpop.f32.mrb[0].mxu0
        %v757 = vpop.f32.mrb[0].mxu0
        %v758 = vadd.f32 %v291, %v757
        %v759 = vpop.f32.mrb[0].mxu0
        %760 = vmatprep.mubr.bf16.mxu0 0
        %761 = vmatmul.mubr.bf16.gmra.mrb[0].mxu0 %v526
        %v762 = vpop.f32.mrb[0].mxu0
        %v763 = vadd.f32 %v291, %v762
        %v764 = vpop.f32.mrb[0].mxu0
        %v765 = vpop.f32.mrb[0].mxu0
        %v766 = vadd.f32 %v291, %v765
        %v767 = vpop.f32.mrb[0].mxu0
        %768 = vmatprep.mubr.bf16.mxu0 0
        %769 = vmatmul.mubr.bf16.gmra.mrb[0].mxu0 %v529
        %v770 = vpop.f32.mrb[0].mxu0
        %v771 = vadd.f32 %v291, %v770
        %v772 = vpop.f32.mrb[0].mxu0
        %v773 = vpop.f32.mrb[0].mxu0
        %v774 = vadd.f32 %v291, %v773
        %v775 = vpop.f32.mrb[0].mxu0
        %776 = vmatprep.mubr.bf16.mxu0 0
        %777 = vmatmul.mubr.bf16.gmra.mrb[0].mxu0 %v532
        %v778 = vpop.f32.mrb[0].mxu0
        %v779 = vadd.f32 %v291, %v778
        %v780 = vpop.f32.mrb[0].mxu0
        %v781 = vpop.f32.mrb[0].mxu0
        %v782 = vadd.f32 %v291, %v781
        %v783 = vpop.f32.mrb[0].mxu0
        %784 = vmatprep.mubr.bf16.mxu0 0
        %785 = vmatmul.mubr.bf16.gmra.mrb[0].mxu0 %v535
        %v786 = vpop.f32.mrb[0].mxu0
        %v787 = vadd.f32 %v291, %v786
        %v788 = vpop.f32.mrb[0].mxu0
        %v789 = vpop.f32.mrb[0].mxu0
        %v790 = vadd.f32 %v291, %v789
        %v791 = vpop.f32.mrb[0].mxu0
        %792 = vmatprep.mubr.bf16.mxu0 0
        %793 = vmatmul.mubr.bf16.gmra.mrb[0].mxu0 %v538
        %v794 = vpop.f32.mrb[0].mxu0
        %v795 = vadd.f32 %v291, %v794
        %v796 = vpop.f32.mrb[0].mxu0
        %v797 = vpop.f32.mrb[0].mxu0
        %v798 = vadd.f32 %v291, %v797
        %v799 = vpop.f32.mrb[0].mxu0
        %800 = vmatprep.mubr.bf16.mxu0 0
        %801 = vmatmul.mubr.bf16.gmra.mrb[0].mxu0 %v541
        %v802 = vpop.f32.mrb[0].mxu0
        %v803 = vadd.f32 %v291, %v802
        %v804 = vpop.f32.mrb[0].mxu0
        %v805 = vpop.f32.mrb[0].mxu0
        %v806 = vadd.f32 %v291, %v805
        %v807 = vpop.f32.mrb[0].mxu0
        %808 = vmatprep.mubr.bf16.mxu0 0
        %809 = vmatmul.mubr.bf16.gmra.mrb[0].mxu0 %v544
        %v810 = vpop.f32.mrb[0].mxu0
        %v811 = vadd.f32 %v291, %v810
        %v812 = vpop.f32.mrb[0].mxu0
        %v813 = vpop.f32.mrb[0].mxu0
        %v814 = vadd.f32 %v291, %v813
        %v815 = vpop.f32.mrb[0].mxu0
        %816 = vmatprep.mubr.bf16.mxu0 0
        %817 = vmatmul.mubr.bf16.gmra.mrb[0].mxu0 %v547
        %v818 = vpop.f32.mrb[0].mxu0
        %v819 = vadd.f32 %v291, %v818
        %v820 = vpop.f32.mrb[0].mxu0
        %v821 = vpop.f32.mrb[0].mxu0
        %v822 = vadd.f32 %v291, %v821
        %v823 = vpop.f32.mrb[0].mxu0
        %824 = vmatprep.mubr.bf16.mxu0 0
        %825 = vmatmul.mubr.bf16.gmra.mrb[0].mxu0 %v550
        %v826 = vpop.f32.mrb[0].mxu0
        %v827 = vadd.f32 %v291, %v826
        %v828 = vpop.f32.mrb[0].mxu0
        %v829 = vpop.f32.mrb[0].mxu0
        %v830 = vadd.f32 %v291, %v829
        %v831 = vpop.f32.mrb[0].mxu0
        %832 = vmatprep.mubr.bf16.mxu0 0
        %833 = vmatmul.mubr.bf16.gmra.mrb[0].mxu0 %v553
        %v834 = vpop.f32.mrb[0].mxu0
        %v835 = vadd.f32 %v291, %v834
        %v836 = vpop.f32.mrb[0].mxu0
        %v837 = vpop.f32.mrb[0].mxu0
        %v838 = vadd.f32 %v291, %v837
        %v839 = vpop.f32.mrb[0].mxu0
        %840 = vmatprep.mubr.bf16.mxu0 0
        %841 = vmatmul.mubr.bf16.gmra.mrb[0].mxu0 %v556
        %v842 = vpop.f32.mrb[0].mxu0
        %v843 = vadd.f32 %v291, %v842
        %v844 = vpop.f32.mrb[0].mxu0
        %v845 = vpop.f32.mrb[0].mxu0
        %v846 = vadd.f32 %v291, %v845
        %v847 = vpop.f32.mrb[0].mxu0
        %848 = vmatprep.mubr.bf16.mxu0 0
        %849 = vmatmul.mubr.bf16.gmra.mrb[0].mxu0 %v559
        %v850 = vpop.f32.mrb[0].mxu0
        %v851 = vadd.f32 %v291, %v850
        %v852 = vpop.f32.mrb[0].mxu0
        %v853 = vpop.f32.mrb[0].mxu0
        %v854 = vadd.f32 %v291, %v853
        %v855 = vpop.f32.mrb[0].mxu0
        %856 = vdwg.mxu0
        %v857 = vmax.f32 %v603, 0.0
        %v858 = vmax.f32 %v606, 0.0
        %v859 = vmax.f32 %v611, 0.0
        %v860 = vmax.f32 %v614, 0.0
        %v861 = vmax.f32 %v619, 0.0
        %v862 = vmax.f32 %v622, 0.0
        %v863 = vmax.f32 %v627, 0.0
        %v864 = vmax.f32 %v630, 0.0
        %v865 = vmax.f32 %v635, 0.0
        %v866 = vmax.f32 %v638, 0.0
        %v867 = vmax.f32 %v643, 0.0
        %v868 = vmax.f32 %v646, 0.0
        %v869 = vmax.f32 %v651, 0.0
        %v870 = vmax.f32 %v654, 0.0
        %v871 = vmax.f32 %v659, 0.0
        %v872 = vmax.f32 %v662, 0.0
        %v873 = vmax.f32 %v667, 0.0
        %v874 = vmax.f32 %v670, 0.0
        %v875 = vmax.f32 %v675, 0.0
        %v876 = vmax.f32 %v678, 0.0
        %v877 = vmax.f32 %v683, 0.0
        %v878 = vmax.f32 %v686, 0.0
        %v879 = vmax.f32 %v691, 0.0
        %v880 = vmax.f32 %v694, 0.0
        %v881 = vmax.f32 %v699, 0.0
        %v882 = vmax.f32 %v702, 0.0
        %v883 = vmax.f32 %v707, 0.0
        %v884 = vmax.f32 %v710, 0.0
        %v885 = vmax.f32 %v715, 0.0
        %v886 = vmax.f32 %v718, 0.0
        %v887 = vmax.f32 %v723, 0.0
        %v888 = vmax.f32 %v726, 0.0
        %v889 = vmax.f32 %v731, 0.0
        %v890 = vmax.f32 %v734, 0.0
        %v891 = vmax.f32 %v739, 0.0
        %v892 = vmax.f32 %v742, 0.0
        %v893 = vmax.f32 %v747, 0.0
        %v894 = vmax.f32 %v750, 0.0
        %v895 = vmax.f32 %v755, 0.0
        %v896 = vmax.f32 %v758, 0.0
        %v897 = vmax.f32 %v763, 0.0
        %v898 = vmax.f32 %v766, 0.0
        %v899 = vmax.f32 %v771, 0.0
        %v900 = vmax.f32 %v774, 0.0
        %v901 = vmax.f32 %v779, 0.0
        %v902 = vmax.f32 %v782, 0.0
        %v903 = vmax.f32 %v787, 0.0
        %v904 = vmax.f32 %v790, 0.0
        %v905 = vmax.f32 %v795, 0.0
        %v906 = vmax.f32 %v798, 0.0
        %v907 = vmax.f32 %v803, 0.0
        %v908 = vmax.f32 %v806, 0.0
        %v909 = vmax.f32 %v811, 0.0
        %v910 = vmax.f32 %v814, 0.0
        %v911 = vmax.f32 %v819, 0.0
        %v912 = vmax.f32 %v822, 0.0
        %v913 = vmax.f32 %v827, 0.0
        %v914 = vmax.f32 %v830, 0.0
        %v915 = vmax.f32 %v835, 0.0
        %v916 = vmax.f32 %v838, 0.0
        %v917 = vmax.f32 %v843, 0.0
        %v918 = vmax.f32 %v846, 0.0
        %v919 = vmax.f32 %v851, 0.0
        %v920 = vmax.f32 %v854, 0.0
        %v921 = vpack.c.bf16 %v858, %v857
        %v922 = vpack.c.bf16 %v860, %v859
        %v923 = vpack.c.bf16 %v862, %v861
        %v924 = vpack.c.bf16 %v864, %v863
        %v925 = vpack.c.bf16 %v866, %v865
        %v926 = vpack.c.bf16 %v868, %v867
        %v927 = vpack.c.bf16 %v870, %v869
        %v928 = vpack.c.bf16 %v872, %v871
        %v929 = vpack.c.bf16 %v874, %v873
        %v930 = vpack.c.bf16 %v876, %v875
        %v931 = vpack.c.bf16 %v878, %v877
        %v932 = vpack.c.bf16 %v880, %v879
        %v933 = vpack.c.bf16 %v882, %v881
        %v934 = vpack.c.bf16 %v884, %v883
        %v935 = vpack.c.bf16 %v886, %v885
        %v936 = vpack.c.bf16 %v888, %v887
        %v937 = vpack.c.bf16 %v890, %v889
        %v938 = vpack.c.bf16 %v892, %v891
        %v939 = vpack.c.bf16 %v894, %v893
        %v940 = vpack.c.bf16 %v896, %v895
        %v941 = vpack.c.bf16 %v898, %v897
        %v942 = vpack.c.bf16 %v900, %v899
        %v943 = vpack.c.bf16 %v902, %v901
        %v944 = vpack.c.bf16 %v904, %v903
        %v945 = vpack.c.bf16 %v906, %v905
        %v946 = vpack.c.bf16 %v908, %v907
        %v947 = vpack.c.bf16 %v910, %v909
        %v948 = vpack.c.bf16 %v912, %v911
        %v949 = vpack.c.bf16 %v914, %v913
        %v950 = vpack.c.bf16 %v916, %v915
        %v951 = vpack.c.bf16 %v918, %v917
        %v952 = vpack.c.bf16 %v920, %v919
        %v985 = vunpack.c.l.b16 %v921
        %v986 = vunpack.c.h.b16 %v921
        %v987 = vunpack.c.l.b16 %v922
        %v988 = vunpack.c.h.b16 %v922
        %v989 = vunpack.c.l.b16 %v923
        %v990 = vunpack.c.h.b16 %v923
        %v991 = vunpack.c.l.b16 %v924
        %v992 = vunpack.c.h.b16 %v924
        %v993 = vunpack.c.l.b16 %v925
        %v994 = vunpack.c.h.b16 %v925
        %v995 = vunpack.c.l.b16 %v926
        %v996 = vunpack.c.h.b16 %v926
        %v997 = vunpack.c.l.b16 %v927
        %v998 = vunpack.c.h.b16 %v927
        %v999 = vunpack.c.l.b16 %v928
        %v1000 = vunpack.c.h.b16 %v928
        %v1001 = vunpack.c.l.b16 %v929
        %v1002 = vunpack.c.h.b16 %v929
        %v1003 = vunpack.c.l.b16 %v930
        %v1004 = vunpack.c.h.b16 %v930
        %v1005 = vunpack.c.l.b16 %v931
        %v1006 = vunpack.c.h.b16 %v931
        %v1007 = vunpack.c.l.b16 %v932
        %v1008 = vunpack.c.h.b16 %v932
        %v1009 = vunpack.c.l.b16 %v933
        %v1010 = vunpack.c.h.b16 %v933
        %v1011 = vunpack.c.l.b16 %v934
        %v1012 = vunpack.c.h.b16 %v934
        %v1013 = vunpack.c.l.b16 %v935
        %v1014 = vunpack.c.h.b16 %v935
        %v1015 = vunpack.c.l.b16 %v936
        %v1016 = vunpack.c.h.b16 %v936
        %v1017 = vunpack.c.l.b16 %v937
        %v1018 = vunpack.c.h.b16 %v937
        %v1019 = vunpack.c.l.b16 %v938
        %v1020 = vunpack.c.h.b16 %v938
        %v1021 = vunpack.c.l.b16 %v939
        %v1022 = vunpack.c.h.b16 %v939
        %v1023 = vunpack.c.l.b16 %v940
        %v1024 = vunpack.c.h.b16 %v940
        %v1025 = vunpack.c.l.b16 %v941
        %v1026 = vunpack.c.h.b16 %v941
        %v1027 = vunpack.c.l.b16 %v942
        %v1028 = vunpack.c.h.b16 %v942
        %v1029 = vunpack.c.l.b16 %v943
        %v1030 = vunpack.c.h.b16 %v943
        %v1031 = vunpack.c.l.b16 %v944
        %v1032 = vunpack.c.h.b16 %v944
        %v1033 = vunpack.c.l.b16 %v945
        %v1034 = vunpack.c.h.b16 %v945
        %v1035 = vunpack.c.l.b16 %v946
        %v1036 = vunpack.c.h.b16 %v946
        %v1037 = vunpack.c.l.b16 %v947
        %v1038 = vunpack.c.h.b16 %v947
        %v1039 = vunpack.c.l.b16 %v948
        %v1040 = vunpack.c.h.b16 %v948
        %v1041 = vunpack.c.l.b16 %v949
        %v1042 = vunpack.c.h.b16 %v949
        %v1043 = vunpack.c.l.b16 %v950
        %v1044 = vunpack.c.h.b16 %v950
        %v1045 = vunpack.c.l.b16 %v951
        %v1046 = vunpack.c.h.b16 %v951
        %v1047 = vunpack.c.l.b16 %v952
        %v1048 = vunpack.c.h.b16 %v952
        %v1049 = vpack.c.b16 %v985, %v985
        %v1050 = vpack.c.b16 %v986, %v986
        %v1051 = vpack.c.b16 %v987, %v987
        %v1052 = vpack.c.b16 %v988, %v988
        %v1053 = vpack.c.b16 %v989, %v989
        %v1054 = vpack.c.b16 %v990, %v990
        %v1055 = vpack.c.b16 %v991, %v991
        %v1056 = vpack.c.b16 %v992, %v992
        %v1057 = vpack.c.b16 %v993, %v993
        %v1058 = vpack.c.b16 %v994, %v994
        %v1059 = vpack.c.b16 %v995, %v995
        %v1060 = vpack.c.b16 %v996, %v996
        %v1061 = vpack.c.b16 %v997, %v997
        %v1062 = vpack.c.b16 %v998, %v998
        %v1063 = vpack.c.b16 %v999, %v999
        %v1064 = vpack.c.b16 %v1000, %v1000
        %v1065 = vpack.c.b16 %v1001, %v1001
        %v1066 = vpack.c.b16 %v1002, %v1002
        %v1067 = vpack.c.b16 %v1003, %v1003
        %v1068 = vpack.c.b16 %v1004, %v1004
        %v1069 = vpack.c.b16 %v1005, %v1005
        %v1070 = vpack.c.b16 %v1006, %v1006
        %v1071 = vpack.c.b16 %v1007, %v1007
        %v1072 = vpack.c.b16 %v1008, %v1008
        %v1073 = vpack.c.b16 %v1009, %v1009
        %v1074 = vpack.c.b16 %v1010, %v1010
        %v1075 = vpack.c.b16 %v1011, %v1011
        %v1076 = vpack.c.b16 %v1012, %v1012
        %v1077 = vpack.c.b16 %v1013, %v1013
        %v1078 = vpack.c.b16 %v1014, %v1014
        %v1079 = vpack.c.b16 %v1015, %v1015
        %v1080 = vpack.c.b16 %v1016, %v1016
        %v1081 = vpack.c.b16 %v1017, %v1017
        %v1082 = vpack.c.b16 %v1018, %v1018
        %v1083 = vpack.c.b16 %v1019, %v1019
        %v1084 = vpack.c.b16 %v1020, %v1020
        %v1085 = vpack.c.b16 %v1021, %v1021
        %v1086 = vpack.c.b16 %v1022, %v1022
        %v1087 = vpack.c.b16 %v1023, %v1023
        %v1088 = vpack.c.b16 %v1024, %v1024
        %v1089 = vpack.c.b16 %v1025, %v1025
        %v1090 = vpack.c.b16 %v1026, %v1026
        %v1091 = vpack.c.b16 %v1027, %v1027
        %v1092 = vpack.c.b16 %v1028, %v1028
        %v1093 = vpack.c.b16 %v1029, %v1029
        %v1094 = vpack.c.b16 %v1030, %v1030
        %v1095 = vpack.c.b16 %v1031, %v1031
        %v1096 = vpack.c.b16 %v1032, %v1032
        %v1097 = vpack.c.b16 %v1033, %v1033
        %v1098 = vpack.c.b16 %v1034, %v1034
        %v1099 = vpack.c.b16 %v1035, %v1035
        %v1100 = vpack.c.b16 %v1036, %v1036
        %v1101 = vpack.c.b16 %v1037, %v1037
        %v1102 = vpack.c.b16 %v1038, %v1038
        %v1103 = vpack.c.b16 %v1039, %v1039
        %v1104 = vpack.c.b16 %v1040, %v1040
        %v1105 = vpack.c.b16 %v1041, %v1041
        %v1106 = vpack.c.b16 %v1042, %v1042
        %v1107 = vpack.c.b16 %v1043, %v1043
        %v1108 = vpack.c.b16 %v1044, %v1044
        %v1109 = vpack.c.b16 %v1045, %v1045
        %v1110 = vpack.c.b16 %v1046, %v1046
        %v1111 = vpack.c.b16 %v1047, %v1047
        %v1112 = vpack.c.b16 %v1048, %v1048
        %1177 = vst [vmem:[%s202] sm:$0xf] %v1049
        %1178 = vst [vmem:[%s202 + $0x4] sm:$0xf] %v1050
        %1179 = vst [vmem:[%s202 + $0x8] sm:$0xf] %v1051
        %1180 = vst [vmem:[%s202 + $0xc] sm:$0xf] %v1052
        %1181 = vst [vmem:[%s202 + $0x10] sm:$0xf] %v1053
        %1182 = vst [vmem:[%s202 + $0x14] sm:$0xf] %v1054
        %1183 = vst [vmem:[%s202 + $0x18] sm:$0xf] %v1055
        %1184 = vst [vmem:[%s202 + $0x1c] sm:$0xf] %v1056
        %1185 = vst [vmem:[%s202 + $0x20] sm:$0xf] %v1057
        %1186 = vst [vmem:[%s202 + $0x24] sm:$0xf] %v1058
        %1187 = vst [vmem:[%s202 + $0x28] sm:$0xf] %v1059
        %1188 = vst [vmem:[%s202 + $0x2c] sm:$0xf] %v1060
        %1189 = vst [vmem:[%s202 + $0x30] sm:$0xf] %v1061
        %1190 = vst [vmem:[%s202 + $0x34] sm:$0xf] %v1062
        %1191 = vst [vmem:[%s202 + $0x38] sm:$0xf] %v1063
        %1192 = vst [vmem:[%s202 + $0x3c] sm:$0xf] %v1064
        %1193 = vst [vmem:[%s202 + $0x40] sm:$0xf] %v1065
        %1194 = vst [vmem:[%s202 + $0x44] sm:$0xf] %v1066
        %1195 = vst [vmem:[%s202 + $0x48] sm:$0xf] %v1067
        %1196 = vst [vmem:[%s202 + $0x4c] sm:$0xf] %v1068
        %1197 = vst [vmem:[%s202 + $0x50] sm:$0xf] %v1069
        %1198 = vst [vmem:[%s202 + $0x54] sm:$0xf] %v1070
        %1199 = vst [vmem:[%s202 + $0x58] sm:$0xf] %v1071
        %1200 = vst [vmem:[%s202 + $0x5c] sm:$0xf] %v1072
        %1201 = vst [vmem:[%s202 + $0x60] sm:$0xf] %v1073
        %1202 = vst [vmem:[%s202 + $0x64] sm:$0xf] %v1074
        %1203 = vst [vmem:[%s202 + $0x68] sm:$0xf] %v1075
        %1204 = vst [vmem:[%s202 + $0x6c] sm:$0xf] %v1076
        %1205 = vst [vmem:[%s202 + $0x70] sm:$0xf] %v1077
        %1206 = vst [vmem:[%s202 + $0x74] sm:$0xf] %v1078
        %1207 = vst [vmem:[%s202 + $0x78] sm:$0xf] %v1079
        %1208 = vst [vmem:[%s202 + $0x7c] sm:$0xf] %v1080
        %1209 = vst [vmem:[%s202 + $0x80] sm:$0xf] %v1081
        %1210 = vst [vmem:[%s202 + $0x84] sm:$0xf] %v1082
        %1211 = vst [vmem:[%s202 + $0x88] sm:$0xf] %v1083
        %1212 = vst [vmem:[%s202 + $0x8c] sm:$0xf] %v1084
        %1213 = vst [vmem:[%s202 + $0x90] sm:$0xf] %v1085
        %1214 = vst [vmem:[%s202 + $0x94] sm:$0xf] %v1086
        %1215 = vst [vmem:[%s202 + $0x98] sm:$0xf] %v1087
        %1216 = vst [vmem:[%s202 + $0x9c] sm:$0xf] %v1088
        %1217 = vst [vmem:[%s202 + $0xa0] sm:$0xf] %v1089
        %1218 = vst [vmem:[%s202 + $0xa4] sm:$0xf] %v1090
        %1219 = vst [vmem:[%s202 + $0xa8] sm:$0xf] %v1091
        %1220 = vst [vmem:[%s202 + $0xac] sm:$0xf] %v1092
        %1221 = vst [vmem:[%s202 + $0xb0] sm:$0xf] %v1093
        %1222 = vst [vmem:[%s202 + $0xb4] sm:$0xf] %v1094
        %1223 = vst [vmem:[%s202 + $0xb8] sm:$0xf] %v1095
        %1224 = vst [vmem:[%s202 + $0xbc] sm:$0xf] %v1096
        %1225 = vst [vmem:[%s202 + $0xc0] sm:$0xf] %v1097
        %1226 = vst [vmem:[%s202 + $0xc4] sm:$0xf] %v1098
        %1227 = vst [vmem:[%s202 + $0xc8] sm:$0xf] %v1099
        %1228 = vst [vmem:[%s202 + $0xcc] sm:$0xf] %v1100
        %1229 = vst [vmem:[%s202 + $0xd0] sm:$0xf] %v1101
        %1230 = vst [vmem:[%s202 + $0xd4] sm:$0xf] %v1102
        %1231 = vst [vmem:[%s202 + $0xd8] sm:$0xf] %v1103
        %1232 = vst [vmem:[%s202 + $0xdc] sm:$0xf] %v1104
        %1233 = vst [vmem:[%s202 + $0xe0] sm:$0xf] %v1105
        %1234 = vst [vmem:[%s202 + $0xe4] sm:$0xf] %v1106
        %1235 = vst [vmem:[%s202 + $0xe8] sm:$0xf] %v1107
        %1236 = vst [vmem:[%s202 + $0xec] sm:$0xf] %v1108
        %1237 = vst [vmem:[%s202 + $0xf0] sm:$0xf] %v1109
        %1238 = vst [vmem:[%s202 + $0xf4] sm:$0xf] %v1110
        %1239 = vst [vmem:[%s202 + $0xf8] sm:$0xf] %v1111
        %1240 = vst [vmem:[%s202 + $0xfc] sm:$0xf] %v1112
        %s1241 = sand.u32 %s117, 1
        %s1242 = scalar_lea.sflag [#allocation3], %s1241
        %s1243 = sand.u32 %s117, 1
        %s1244 = smul.addr %s1243, 256
        %s1245 = scalar_lea.vmem [#allocation2], %s1244
        // Predicated region
        $region33: #{tpu_custom_call.1} parent=31 // pred_check
          %p1246 = pneg %p127
        $region34: #{tpu_custom_call.1} parent=31 // pred_check_branch
          %1248 = sbr.rel (%p1246) target = $region36
        $region35: #{tpu_custom_call.1} parent=31 // pred_region
          %s1249 = smul.u32 64, %s21
          %s1251 = ssub.s32 4096, 4096
          %1252 = vsyncadd %s1242, %s1251
          %s1253 = sadd.s32 %s22, %s1249
          %s1254 = smul.addr %s1253, 64
          %s1255 = scalar_lea.hbm %s3, %s1254
          %s1256 = sshll.u32 %s1245, 4
          %s1257 = int_to_ptr.vmem [resolvable:$true] %s1256
          %1262 = dma.vmem_to_hbm [thread:$0]  %s1257, 4096, %s1255, %s1242, 64, 64, 4
        $region36: #{tpu_custom_call.1} parent=31 // pred_fallthru
          _
      $region32: #{tpu_custom_call.1} parent=5 // pred_fallthru
        _
      %p1263 = scmp.le.s32.totalorder 2, %s12
      // Predicated region
      $region37: #{tpu_custom_call.1} parent=5 // pred_check
        %p1264 = pneg %p1263
      $region38: #{tpu_custom_call.1} parent=5 // pred_check_branch
        %1266 = sbr.rel (%p1264) target = $region40
      $region39: #{tpu_custom_call.1} parent=5 // pred_region
        %s1267 = ssub.s32 %s12, 2
        // Predicated region
        $region41: #{tpu_custom_call.1} parent=39 // pred_check
          %p1268 = pneg %p133
        $region42: #{tpu_custom_call.1} parent=39 // pred_check_branch
          %1270 = sbr.rel (%p1268) target = $region44
        $region43: #{tpu_custom_call.1} parent=39 // pred_region
          %s1271 = sand.u32 %s118, 1
          %s1272 = scalar_lea.sflag [#allocation3], %s1271
          %s1273 = sand.u32 %s118, 1
          %s1274 = smul.addr %s1273, 256
          %s1275 = scalar_lea.vmem [#allocation2], %s1274
          %1276 = dma.done %s1272, 4096
        $region44: #{tpu_custom_call.1} parent=39 // pred_fallthru
          _
      $region40: #{tpu_custom_call.1} parent=5 // pred_fallthru
        _
    $region6: #{tpu_custom_call.1} parent=1 // loop_footer
      %s16 = sadd.s32 1, %s12
    $region7: #{tpu_custom_call.1} parent=1 // loop_footer_branch
      %11 = sbr.rel target = $region3
    $region8: #{tpu_custom_call.1} parent=1 // loop_exit
      _
    %1277 = vsyncpa [#allocation3], 1
    %s1278 = scalar_lea.sflag [#allocation3], 1
    %1279 = vsyncpa %s1278, 1

</llo_original>
